<compile_context>
chip_gen: v5e
topology: v5e:2x2
jax: 0.10.0
libtpu: 0.0.40
codegen_flags: <defaults>
</compile_context>

<pallas_src>
import functools

import jax
import jax.numpy as jnp
from jax.experimental import pallas as pl
from jax.experimental.pallas import tpu as pltpu


# --------------------------------------------------------------------------- #
# Kernel                                                                       #
# --------------------------------------------------------------------------- #
def _wbce_kernel(pw_ref, pred_ref, targ_ref, m_ref, out_ref, *,
                 inv_total, batch, tile_b, num_inner):
    # pw_ref:   (1, 1)      SMEM f32   pos_weight
    # pred_ref: (1, 1, tb)  VMEM f32   logits tile (lane-dense)
    # targ_ref: (1, 1, tb)  VMEM f32   targets tile (lane-dense)
    # m_ref:    (tb, K)     VMEM       mask tile in its native narrow dtype
    # out_ref:  (1, 1, 1)   VMEM f32   per-outer partial sum (resident accumulator)
    o = pl.program_id(0)
    i = pl.program_id(1)

    @pl.when(i == 0)
    def _():
        out_ref[...] = jnp.zeros_like(out_ref)

    x = pred_ref[0]                       # (1, tb)
    y = targ_ref[0]                       # (1, tb)
    pw = pw_ref[0, 0]                     # scalar

    # present[b] = sum_k M[b, k], computed on the MXU (keeps the per-byte
    # reduction off the 4 VALU slots so HBM remains the bottleneck):
    #   ones(8, K) . M(tb, K)^T -> (8, tb) f32, every row identical; keep row 0.
    m = m_ref[...]
    if not jnp.issubdtype(m.dtype, jnp.floating):
        m = m.astype(jnp.bfloat16)        # {0,1} exact in bf16; f32 accumulation
    # TODO(synk): on v5e/v6e an int8 MXU dot (no cast), or the packed-int32 VPU
    # trick, would shave the remaining per-byte convert cost further.
    ones_rows = jnp.ones((8, m.shape[1]), dtype=m.dtype)
    presents = jax.lax.dot_general(
        ones_rows, m, (((1,), (1,)), ((), ())),
        preferred_element_type=jnp.float32)            # (8, tb)
    present = presents[0:1, :]                          # (1, tb)
    sample_w = present * inv_total                      # (1, tb)

    # Numerically stable BCE-with-logits with pos_weight p:
    #   loss = (1-y)*x + (1 + (p-1)*y) * softplus(-x)
    #   softplus(-x) = max(-x, 0) + log1p(exp(-|x|))
    softplus_neg_x = jnp.maximum(-x, 0.0) + jnp.log1p(jnp.exp(-jnp.abs(x)))
    losses = (1.0 - y) * x + (1.0 + (pw - 1.0) * y) * softplus_neg_x   # (1, tb)

    # Ragged-tail mask: samples >= batch contribute exactly 0.  jnp.where (not
    # a multiply) so garbage in out-of-bounds tile reads can never propagate.
    tile = o * num_inner + i
    col = jax.lax.broadcasted_iota(jnp.int32, x.shape, 1) + tile * tile_b
    weighted = jnp.where(col < batch, losses * sample_w, 0.0)

    out_ref[...] += jnp.sum(weighted)


# --------------------------------------------------------------------------- #
# Wrapper                                                                      #
# --------------------------------------------------------------------------- #
def _round_up(x, m):
    return -(-x // m) * m


def _tpu_vmem_bytes():
    try:
        return int(pltpu.get_tpu_info().vmem_capacity_bytes)
    except Exception:
        return 64 << 20                   # conservative (v7x per-TC)


def _num_tensorcores():
    # "parallel" outer-axis width: 2 only where one Pallas device really owns
    # two TensorCores (v4/v5p megacore, v7x); 1 on v5e/v6e so we don't inflate
    # padding granularity / DMA an extra fully-masked tile.
    try:
        info = pltpu.get_tpu_info()
        for attr in ("num_cores", "core_count", "num_tensorcores",
                     "tensor_cores_per_chip", "cores_per_chip"):
            v = getattr(info, attr, None)
            if isinstance(v, int) and v > 0:
                return max(1, min(int(v), 2))
    except Exception:
        pass
    kind = ""
    try:
        kind = jax.devices()[0].device_kind.lower()
    except Exception:
        pass
    return 2 if any(t in kind for t in ("v4", "v5p", "7x", "tpu7", "tpu v7")) else 1


def weighted_bce_loss(predictions, targets, M, pos_weight,
                      max_tile_bytes=None, num_outer=None):
    """predictions, targets: (B,) ; M: (B, T, D) presence mask ; pos_weight scalar."""
    B = predictions.shape[0]
    T, D = M.shape[1], M.shape[2]
    K = T * D

    # Stream the mask in its narrow native dtype; the widening cast happens
    # inside the kernel, not as an HBM-inflating XLA pass.
    m2 = M.reshape(B, K)
    if m2.dtype == jnp.bool_:
        # TODO(synk): produce the mask as int8 upstream; this astype is a full
        # extra HBM read+write pass over M that the kernel otherwise avoids.
        m2 = m2.astype(jnp.int8)
    itemsize = jnp.dtype(m2.dtype).itemsize

    if max_tile_bytes is None:
        # Per-M-buffer budget (x2 for double buffering), sized off real VMEM:
        # ~16 MiB on v5e/v6e (128 MiB physical), ~8 MiB on v7x (64 MiB per TC).
        max_tile_bytes = int(max(1 << 20, min(16 << 20, _tpu_vmem_bytes() // 8)))

    # ---- tile selection ---------------------------------------------------
    if B * K * itemsize <= max_tile_bytes:
        tb = B                                    # single block, no padding at all
    else:
        tb = max(8, (max_tile_bytes // (K * itemsize)) // 8 * 8)
        # TODO(synk): if 8 * K * itemsize already exceeds the budget, add a
        # second ("arbitrary") reduction grid axis over T*D.
    n_tiles = pl.cdiv(B, tb)
    if num_outer is None:
        num_outer = _num_tensorcores() if n_tiles > 1 else 1
    num_outer = max(1, min(int(num_outer), n_tiles))
    num_inner = pl.cdiv(n_tiles, num_outer)
    n_total = num_outer * num_inner               # >= n_tiles (over-cover is masked)

    # Only the tiny per-sample vectors are padded; the big mask is never copied.
    b_pad = n_total * tb
    pred2 = predictions.reshape(B).astype(jnp.float32)
    targ2 = targets.reshape(B).astype(jnp.float32)
    if b_pad != B:
        pred2 = jnp.pad(pred2, (0, b_pad - B))
        targ2 = jnp.pad(targ2, (0, b_pad - B))
    pred3 = pred2.reshape(n_total, 1, tb)         # lane-dense (1, tb) blocks
    targ3 = targ2.reshape(n_total, 1, tb)
    pw = jnp.asarray(pos_weight, jnp.float32).reshape(1, 1)

    kernel = functools.partial(_wbce_kernel, inv_total=1.0 / float(K),
                               batch=B, tile_b=tb, num_inner=num_inner)

    # Tiles that a multi-core split pushes fully past B re-read the last real
    # mask tile (clamped block index); the in-kernel tail mask zeroes them.
    def mask_index_map(o, i):
        return (jnp.minimum(o * num_inner + i, n_tiles - 1), 0)

    def vec_index_map(o, i):
        return (o * num_inner + i, 0, 0)

    # Explicit VMEM budget: double-buffered mask tiles + lane-dense pred/targ
    # buffers (+ Mosaic scratch headroom).  Well under physical VMEM on all gens.
    mask_buf_bytes = 2 * tb * K * itemsize
    vec_buf_bytes = 2 * 2 * 8 * _round_up(tb, 128) * 4
    vmem_limit = int(min(max(32 << 20, mask_buf_bytes + vec_buf_bytes + (8 << 20)),
                         112 << 20))

    cost = pl.CostEstimate(
        flops=16 * K * b_pad + 20 * b_pad,
        transcendentals=2 * b_pad,
        bytes_accessed=B * K * itemsize + 2 * b_pad * 4 + 4 + num_outer * 4,
    )

    partials = pl.pallas_call(
        kernel,
        out_shape=jax.ShapeDtypeStruct((num_outer, 1, 1), jnp.float32),
        grid=(num_outer, num_inner),
        in_specs=[
            pl.BlockSpec(memory_space=pltpu.MemorySpace.SMEM),   # pos_weight
            pl.BlockSpec((1, 1, tb), vec_index_map),             # predictions
            pl.BlockSpec((1, 1, tb), vec_index_map),             # targets
            pl.BlockSpec((tb, K), mask_index_map),               # mask M (native dtype)
        ],
        out_specs=pl.BlockSpec((1, 1, 1), lambda o, i: (o, 0, 0)),
        compiler_params=pltpu.CompilerParams(
            dimension_semantics=("parallel", "arbitrary"),
            vmem_limit_bytes=vmem_limit),
        cost_estimate=cost,
    )(pw, pred3, targ3, m2)

    # Combine the per-core partial sums; mean over the true (unpadded) batch.
    return jnp.sum(partials) / B


# --------------------------------------------------------------------------- #
# Reference + tests                                                            #
# --------------------------------------------------------------------------- #
def _reference(predictions, targets, M, pos_weight):
    # Pure-JAX mirror of the PyTorch forward, for a correctness check.
    present = jnp.sum(M, axis=(1, 2))
    total = M.shape[1] * M.shape[2]
    sample_w = 1.0 - (total - present) / total
    x, y, p = predictions, targets, pos_weight
    sp = jnp.maximum(-x, 0.0) + jnp.log1p(jnp.exp(-jnp.abs(x)))
    losses = (1.0 - y) * x + (1.0 + (p - 1.0) * y) * sp
    return jnp.mean(losses * sample_w)


if __name__ == "__main__":
    pos_weight = 2.0  # deterministic "parameter" from __init__

    # --- Test 1: single-block path --------------------------------------- #
    B, T, D = 8, 16, 32
    k1, k2, k3 = jax.random.split(jax.random.PRNGKey(0), 3)
    predictions = jax.random.normal(k1, (B,), dtype=jnp.float32)          # logits
    targets = jax.random.bernoulli(k2, 0.5, (B,)).astype(jnp.float32)     # {0,1}
    M = jax.random.bernoulli(k3, 0.7, (B, T, D)).astype(jnp.int8)         # narrow mask

    loss = jax.block_until_ready(weighted_bce_loss(predictions, targets, M, pos_weight))
    ref = _reference(predictions, targets, M.astype(jnp.float32), pos_weight)
    assert jnp.allclose(loss, ref, atol=1e-5, rtol=1e-5), (loss, ref)

    # --- Test 2: tiled path with ragged tail (in-kernel masking) ---------- #
    B2 = 70
    k4, k5, k6 = jax.random.split(jax.random.PRNGKey(1), 3)
    predictions2 = jax.random.normal(k4, (B2,), dtype=jnp.float32)
    targets2 = jax.random.bernoulli(k5, 0.5, (B2,)).astype(jnp.float32)
    M2 = jax.random.bernoulli(k6, 0.7, (B2, T, D)).astype(jnp.int8)

    loss2 = jax.block_until_ready(
        weighted_bce_loss(predictions2, targets2, M2, pos_weight,
                          max_tile_bytes=16 * 1024))
    ref2 = _reference(predictions2, targets2, M2.astype(jnp.float32), pos_weight)
    assert jnp.allclose(loss2, ref2, atol=1e-5, rtol=1e-5), (loss2, ref2)

    # --- Test 3: forced 2-partial ("parallel") path with a clamped tile --- #
    loss3 = jax.block_until_ready(
        weighted_bce_loss(predictions2, targets2, M2, pos_weight,
                          max_tile_bytes=16 * 1024, num_outer=2))
    assert jnp.allclose(loss3, ref2, atol=1e-5, rtol=1e-5), (loss3, ref2)

    print("KERNEL_OK")
</pallas_src>

<mosaic_0001>
module attributes {stable_mosaic.version = 11 : i64} {
  func.func @_wbce_kernel(%arg0: i32, %arg1: i32, %arg2: memref<1x1xf32, #tpu.memory_space<smem>>, %arg3: memref<1x1x8xf32, #tpu.memory_space<vmem>>, %arg4: memref<1x1x8xf32, #tpu.memory_space<vmem>>, %arg5: memref<8x512xi8, #tpu.memory_space<vmem>>, %arg6: memref<1x1x1xf32, #tpu.memory_space<vmem>>) attributes {dimension_semantics = [#tpu.dimension_semantics<parallel>, #tpu.dimension_semantics<arbitrary>], iteration_bounds = array<i64: 1, 1>, scalar_prefetch = 0 : i64, scratch_operands = 0 : i64, tpu.core_type = #tpu.core_type<tc>, window_params = [{transform_indices = @transform_0, window_bounds = array<i64: 1, 1>}, {transform_indices = @transform_1, window_bounds = array<i64: 1, 1, 8>}, {transform_indices = @transform_2, window_bounds = array<i64: 1, 1, 8>}, {transform_indices = @transform_3, window_bounds = array<i64: 8, 512>}, {transform_indices = @transform_4, window_bounds = array<i64: 1, 1, 1>}]} {
    %c0_i32 = arith.constant 0 : i32
    %0 = arith.cmpi eq, %arg1, %c0_i32 : i32
    %1 = arith.extui %0 : i1 to i32
    %c0_i32_0 = arith.constant 0 : i32
    %2 = arith.cmpi ne, %1, %c0_i32_0 : i32
    scf.if %2 {
      %cst_27 = arith.constant 0.000000e+00 : f32
      %54 = vector.broadcast %cst_27 : f32 to vector<1x1x1xf32>
      %c0_28 = arith.constant 0 : index
      %c0_29 = arith.constant 0 : index
      %c0_30 = arith.constant 0 : index
      %55 = vector.load %arg6[%c0_28, %c0_29, %c0_30] : memref<1x1x1xf32, #tpu.memory_space<vmem>>, vector<1x1x1xf32>
      tpu.vector_store %arg6[%c0_28, %c0_29, %c0_30], %54 {strides = array<i32>} : memref<1x1x1xf32, #tpu.memory_space<vmem>>, vector<1x1x1xf32>,
    } else {
    }
    %c0 = arith.constant 0 : index
    %c0_1 = arith.constant 0 : index
    %c0_2 = arith.constant 0 : index
    %3 = vector.load %arg3[%c0, %c0_1, %c0_2] : memref<1x1x8xf32, #tpu.memory_space<vmem>>, vector<1x1x8xf32>
    %4 = vector.shape_cast %3 : vector<1x1x8xf32> to vector<1x8xf32>
    %c0_3 = arith.constant 0 : index
    %c0_4 = arith.constant 0 : index
    %c0_5 = arith.constant 0 : index
    %5 = vector.load %arg4[%c0_3, %c0_4, %c0_5] : memref<1x1x8xf32, #tpu.memory_space<vmem>>, vector<1x1x8xf32>
    %6 = vector.shape_cast %5 : vector<1x1x8xf32> to vector<1x8xf32>
    %c0_6 = arith.constant 0 : index
    %c0_7 = arith.constant 0 : index
    %7 = memref.load %arg2[%c0_6, %c0_7] : memref<1x1xf32, #tpu.memory_space<smem>>
    %c0_8 = arith.constant 0 : index
    %c0_9 = arith.constant 0 : index
    %8 = vector.load %arg5[%c0_8, %c0_9] : memref<8x512xi8, #tpu.memory_space<vmem>>, vector<8x512xi8>
    %9 = arith.sitofp %8 : vector<8x512xi8> to vector<8x512xbf16>
    %cst = arith.constant 1.000000e+00 : bf16
    %10 = vector.broadcast %cst : bf16 to vector<8x512xbf16>
    %cst_10 = arith.constant dense<0.000000e+00> : vector<8x8xf32>
    %11 = tpu.matmul %10, %9, %cst_10 {dimension_numbers = #tpu.dot_dimension_numbers<[1], [1], [0], [0], [0, 0, 1, 0], [], []>} : vector<8x512xbf16>, vector<8x512xbf16>, vector<8x8xf32> -> vector<8x8xf32>
    %12 = vector.extract_strided_slice %11 {offsets = [0, 0], sizes = [1, 8], strides = [1, 1]} : vector<8x8xf32> to vector<1x8xf32>
    %cst_11 = arith.constant 0.001953125 : f32
    %13 = vector.broadcast %cst_11 : f32 to vector<1x8xf32>
    %14 = arith.mulf %12, %13 : vector<1x8xf32>
    %cst_12 = arith.constant 0.000000e+00 : f32
    %15 = vector.broadcast %cst_12 : f32 to vector<1x8xf32>
    %16 = arith.subf %15, %4 : vector<1x8xf32>
    %cst_13 = arith.constant 0.000000e+00 : f32
    %17 = vector.broadcast %cst_13 : f32 to vector<1x8xf32>
    %18 = arith.maximumf %16, %17 : vector<1x8xf32>
    %19 = math.absf %4 : vector<1x8xf32>
    %cst_14 = arith.constant 0.000000e+00 : f32
    %20 = vector.broadcast %cst_14 : f32 to vector<1x8xf32>
    %21 = arith.subf %20, %19 : vector<1x8xf32>
    %22 = math.exp %21 : vector<1x8xf32>
    %23 = math.log1p %22 : vector<1x8xf32>
    %24 = arith.addf %18, %23 : vector<1x8xf32>
    %cst_15 = arith.constant 1.000000e+00 : f32
    %25 = vector.broadcast %cst_15 : f32 to vector<1x8xf32>
    %26 = arith.subf %25, %6 : vector<1x8xf32>
    %27 = arith.mulf %26, %4 : vector<1x8xf32>
    %cst_16 = arith.constant 1.000000e+00 : f32
    %28 = arith.subf %7, %cst_16 : f32
    %29 = vector.broadcast %28 : f32 to vector<1x8xf32>
    %30 = arith.mulf %29, %6 : vector<1x8xf32>
    %cst_17 = arith.constant 1.000000e+00 : f32
    %31 = vector.broadcast %cst_17 : f32 to vector<1x8xf32>
    %32 = arith.addf %31, %30 : vector<1x8xf32>
    %33 = arith.mulf %32, %24 : vector<1x8xf32>
    %34 = arith.addf %27, %33 : vector<1x8xf32>
    %c1_i32 = arith.constant 1 : i32
    %35 = arith.muli %arg0, %c1_i32 : i32
    %36 = arith.addi %35, %arg1 : i32
    %37 = tpu.iota {dimensions = array<i32: 1>} : vector<1x8xi32>
    %c8_i32 = arith.constant 8 : i32
    %38 = arith.muli %36, %c8_i32 : i32
    %39 = vector.broadcast %38 : i32 to vector<1x8xi32>
    %40 = arith.addi %37, %39 : vector<1x8xi32>
    %c8_i32_18 = arith.constant 8 : i32
    %41 = vector.broadcast %c8_i32_18 : i32 to vector<1x8xi32>
    %42 = arith.cmpi slt, %40, %41 : vector<1x8xi32>
    %43 = arith.mulf %34, %14 : vector<1x8xf32>
    %cst_19 = arith.constant 0.000000e+00 : f32
    %44 = vector.broadcast %cst_19 : f32 to vector<1x8xf32>
    %45 = arith.select %42, %43, %44 : vector<1x8xi1>, vector<1x8xf32>
    %c0_20 = arith.constant 0 : index
    %c0_21 = arith.constant 0 : index
    %c0_22 = arith.constant 0 : index
    %46 = vector.load %arg6[%c0_20, %c0_21, %c0_22] : memref<1x1x1xf32, #tpu.memory_space<vmem>>, vector<1x1x1xf32>
    %47 = vector.shape_cast %45 : vector<1x8xf32> to vector<1x1x8xf32>
    %cst_23 = arith.constant dense<0.000000e+00> : vector<1xf32>
    %48 = vector.multi_reduction <add>, %47, %cst_23 [1, 2] : vector<1x1x8xf32> to vector<1xf32>
    %49 = vector.shape_cast %48 : vector<1xf32> to vector<1x1x1xf32>
    %50 = vector.extract %49[0, 0, 0] : f32 from vector<1x1x1xf32>
    %51 = vector.broadcast %50 : f32 to vector<1x1x1xf32>
    %52 = arith.addf %46, %51 : vector<1x1x1xf32>
    %c0_24 = arith.constant 0 : index
    %c0_25 = arith.constant 0 : index
    %c0_26 = arith.constant 0 : index
    %53 = vector.load %arg6[%c0_24, %c0_25, %c0_26] : memref<1x1x1xf32, #tpu.memory_space<vmem>>, vector<1x1x1xf32>
    tpu.vector_store %arg6[%c0_24, %c0_25, %c0_26], %52 {strides = array<i32>} : memref<1x1x1xf32, #tpu.memory_space<vmem>>, vector<1x1x1xf32>,
    return
  }
  func.func @transform_0(%arg0: i32, %arg1: i32) -> (i32, i32) {
    %c0_i32 = arith.constant 0 : i32
    %c0_i32_0 = arith.constant 0 : i32
    %c0_i32_1 = arith.constant 0 : i32
    return %c0_i32, %c0_i32_0 : i32, i32
  }
  func.func @transform_1(%arg0: i32, %arg1: i32) -> (i32, i32, i32) {
    %c1_i32 = arith.constant 1 : i32
    %0 = arith.muli %arg0, %c1_i32 : i32
    %1 = arith.addi %0, %arg1 : i32
    %c0_i32 = arith.constant 0 : i32
    %c0_i32_0 = arith.constant 0 : i32
    %c0_i32_1 = arith.constant 0 : i32
    return %1, %c0_i32, %c0_i32_0 : i32, i32, i32
  }
  func.func @transform_2(%arg0: i32, %arg1: i32) -> (i32, i32, i32) {
    %c1_i32 = arith.constant 1 : i32
    %0 = arith.muli %arg0, %c1_i32 : i32
    %1 = arith.addi %0, %arg1 : i32
    %c0_i32 = arith.constant 0 : i32
    %c0_i32_0 = arith.constant 0 : i32
    %c0_i32_1 = arith.constant 0 : i32
    return %1, %c0_i32, %c0_i32_0 : i32, i32, i32
  }
  func.func @transform_3(%arg0: i32, %arg1: i32) -> (i32, i32) {
    %c1_i32 = arith.constant 1 : i32
    %0 = arith.muli %arg0, %c1_i32 : i32
    %1 = arith.addi %0, %arg1 : i32
    %c0_i32 = arith.constant 0 : i32
    %2 = arith.minsi %1, %c0_i32 : i32
    %c0_i32_0 = arith.constant 0 : i32
    %c0_i32_1 = arith.constant 0 : i32
    return %2, %c0_i32_0 : i32, i32
  }
  func.func @transform_4(%arg0: i32, %arg1: i32) -> (i32, i32, i32) {
    %c0_i32 = arith.constant 0 : i32
    %c0_i32_0 = arith.constant 0 : i32
    %c0_i32_1 = arith.constant 0 : i32
    return %arg0, %c0_i32, %c0_i32_0 : i32, i32, i32
  }
}

</mosaic_0001>

<llo_original>
// kernel: tpu_custom_call.1
$region0: #{tpu_custom_call.1}
  #allocation0 [shape = 'u32[]', space=smem, size = 0x4, offset = 0x4, fixed_abs, tag = 'smem constant byte address 0x4 - core index']
  #allocation1 [shape = 'u32[72,128]{1,0:T(1,128)}', space=vmem, size = 0x9000, scoped, tag = 'internal scratch']
  #allocation2 [shape = 'f32[1,1]{1,0:T(1,128)S(6)}', space=smem, size = 0x200, scoped, tag = 'scoped memory for tpu_custom_call.1']
  %s0 = inlined_call_operand.<no memory space> [shape: f32[1,1], index: 0, kind: input, shape index: {}]
  %s1 = inlined_call_operand.vmem [shape: f32[1,1,8], index: 1, kind: input, shape index: {}]
  %s2 = inlined_call_operand.vmem [shape: f32[1,1,8], index: 2, kind: input, shape index: {}]
  %s3 = inlined_call_operand.hbm [shape: s8[8,512], index: 3, kind: input, shape index: {}]
  %s4 = inlined_call_operand.hbm [shape: f32[1,1,1], index: 4, kind: output, shape index: {}]
  %s5 = sld [smem:[#allocation0]]
  $region34: #{tpu_custom_call.1} parent=0
    _
  %s7 = ssub.s32 1, %s5
  %s8 = scalar_select 0, %s7, %s5
  %9 = sst [smem:[#allocation2]] %s0
  $region1: #{tpu_custom_call.1} parent=0
    #allocation3 [shape = 'u8[4096]{0}', space=vmem, size = 0x1000, scoped, tag = 'input window, operand 3, single buffered']
    #allocation4 [shape = 's32[1]{0}', space=sflag, size = 0x4, scoped, tag = 'scoped memory for tpu_custom_call.1']
    #allocation5 [shape = 's32[1]{0}', space=sflag, size = 0x4, scoped, tag = 'scoped memory for tpu_custom_call.1']
    #allocation6 [shape = 'u8[512]{0}', space=vmem, size = 0x400, scoped, tag = 'output window, operand 0, single buffered']
    %10 = vsyncpa [#allocation4], 0
    %11 = vsyncpa [#allocation5], 0
    // Predicated region
    $region2: #{tpu_custom_call.1} parent=1 // pred_check
      _
    $region3: #{tpu_custom_call.1} parent=1 // pred_check_branch
      %13 = sbr.rel (0) target = $region5
    $region4: #{tpu_custom_call.1} parent=1 // pred_region
      _
    $region5: #{tpu_custom_call.1} parent=1 // pred_fallthru
      _
    // Predicated region
    $region6: #{tpu_custom_call.1} parent=1 // pred_check
      _
    $region7: #{tpu_custom_call.1} parent=1 // pred_check_branch
      %15 = sbr.rel (0) target = $region9
    $region8: #{tpu_custom_call.1} parent=1 // pred_region
      %s16 = sadd.s32 0, 0
      %p17 = scmp.lt.s32.totalorder %s16, 0
      %s18 = scalar_select %p17, %s16, 0
      %s19 = scalar_lea.vmem %s1, %s18
      %s20 = sadd.s32 0, 0
    $region9: #{tpu_custom_call.1} parent=1 // pred_fallthru
      _
    // Predicated region
    $region10: #{tpu_custom_call.1} parent=1 // pred_check
      _
    $region11: #{tpu_custom_call.1} parent=1 // pred_check_branch
      %22 = sbr.rel (0) target = $region13
    $region12: #{tpu_custom_call.1} parent=1 // pred_region
      %s23 = sadd.s32 0, 0
      %p24 = scmp.lt.s32.totalorder %s23, 0
      %s25 = scalar_select %p24, %s23, 0
      %s26 = scalar_lea.vmem %s2, %s25
      %s27 = sadd.s32 0, 0
    $region13: #{tpu_custom_call.1} parent=1 // pred_fallthru
      _
    // Predicated region
    $region14: #{tpu_custom_call.1} parent=1 // pred_check
      _
    $region15: #{tpu_custom_call.1} parent=1 // pred_check_branch
      %29 = sbr.rel (0) target = $region17
    $region16: #{tpu_custom_call.1} parent=1 // pred_region
      %s30 = sadd.s32 0, 0
      %p31 = scmp.lt.s32.totalorder %s30, 0
      %s32 = scalar_select %p31, %s30, 0
      %34 = vsyncadd [#allocation4], 0
      %s35 = smul.addr %s32, 4
      %s36 = smul.addr %s35, 2
      %s37 = scalar_lea.hbm %s3, %s36
      %s39 = sshll.u32 %s37, 4
      %s40 = int_to_ptr.hbm [resolvable:$true] %s39
      %s41 = sshll.u32 [#allocation3], 4
      %s42 = int_to_ptr.vmem [resolvable:$true] %s41
      %44 = dma.hbm_to_vmem [thread:$0]  %s40, 128, %s42, [#allocation4]
    $region17: #{tpu_custom_call.1} parent=1 // pred_fallthru
      _
    // Predicated region
    $region18: #{tpu_custom_call.1} parent=1 // pred_check
      _
    $region19: #{tpu_custom_call.1} parent=1 // pred_check_branch
      %46 = sbr.rel (0) target = $region21
    $region20: #{tpu_custom_call.1} parent=1 // pred_region
      %48 = dma.done [#allocation4], 128
    $region21: #{tpu_custom_call.1} parent=1 // pred_fallthru
      _
    %s49 = sadd.s32 0, 0
    %p50 = scmp.lt.s32.totalorder %s49, 0
    %s51 = scalar_select %p50, %s49, 0
    %s52 = scalar_lea.vmem %s1, %s51
    %s53 = sadd.s32 0, 0
    %p54 = scmp.lt.s32.totalorder %s53, 0
    %s55 = scalar_select %p54, %s53, 0
    %s56 = scalar_lea.vmem %s2, %s55
    %s57 = sadd.s32 0, 0
    %p58 = scmp.lt.s32.totalorder %s57, 0
    %s59 = scalar_select %p58, %s57, 0
    %s60 = scalar_lea.vmem %s1, %s59
    %s61 = sadd.s32 0, 0
    %s62 = sadd.s32 0, 0
    %p63 = scmp.lt.s32.totalorder %s62, 0
    %s64 = scalar_select %p63, %s62, 0
    %s65 = scalar_lea.vmem %s2, %s64
    %s66 = sadd.s32 0, 0
    %s67 = sadd.s32 0, 0
    %p68 = scmp.lt.s32.totalorder %s67, 0
    %s69 = scalar_select %p68, %s67, 0
    %p72 = scmp.eq.s32.totalorder 0, 0
    // Predicated region
    $region22: #{tpu_custom_call.1} parent=1 // pred_check
      %p73 = pneg %p72
    $region23: #{tpu_custom_call.1} parent=1 // pred_check_branch
      %75 = sbr.rel (%p73) target = $region25
    $region24: #{tpu_custom_call.1} parent=1 // pred_region
      %vm76 = vcmask 0
      %77 = vst.msk [vmem:[#allocation6] sm:$0x1] %vm76, 0.0
    $region25: #{tpu_custom_call.1} parent=1 // pred_fallthru
      _
    %v78 = vld [vmem:[%s60] sm:$0x1]
    %v79 = vld [vmem:[%s65] sm:$0x1]
    %s80 = sld [smem:[#allocation2]]
    %v81 = vld [vmem:[#allocation3] sm:$0xff]
    %v82 = vunpack.c.0.s8 %v81
    %v83 = vunpack.c.1.s8 %v81
    %v84 = vunpack.c.2.s8 %v81
    %v85 = vunpack.c.3.s8 %v81
    %v86 = vcvt.s32.f32 %v82
    %v87 = vcvt.s32.f32 %v83
    %v88 = vcvt.s32.f32 %v84
    %v89 = vcvt.s32.f32 %v85
    %v90 = vpack.c.bf16 %v86, %v86
    %v91 = vpack.c.bf16 %v87, %v87
    %v92 = vpack.c.bf16 %v88, %v88
    %v93 = vpack.c.bf16 %v89, %v89
    %94 = vmatpush.bf16.xpose.msra.mxu0 0
    %95 = vmatpush.bf16.xpose.msra.mxu0 0
    %96 = vmatpush.bf16.xpose.msra.mxu0 0
    %97 = vmatpush.bf16.xpose.msra.mxu0 0
    %98 = vmatpush.bf16.xpose.msra.mxu0 0
    %99 = vmatpush.bf16.xpose.msra.mxu0 0
    %100 = vmatpush.bf16.xpose.msra.mxu0 0
    %101 = vmatpush.bf16.xpose.msra.mxu0 %v90
    %102 = vmatmul.bf16.gmra.mxu0 1065369472
    %v103 = vpop.f32.mrf.mxu0
    %v104 = vadd.f32 0.0, %v103
    %v105 = vpop.f32.mrf.mxu0
    %106 = vdwg.mxu0
    %107 = vmatpush.bf16.xpose.msra.mxu0 0
    %108 = vmatpush.bf16.xpose.msra.mxu0 0
    %109 = vmatpush.bf16.xpose.msra.mxu0 0
    %110 = vmatpush.bf16.xpose.msra.mxu0 0
    %111 = vmatpush.bf16.xpose.msra.mxu0 0
    %112 = vmatpush.bf16.xpose.msra.mxu0 0
    %113 = vmatpush.bf16.xpose.msra.mxu0 0
    %114 = vmatpush.bf16.xpose.msra.mxu0 %v91
    %115 = vmatmul.bf16.gmra.mxu0 1065369472
    %v116 = vpop.f32.mrf.mxu0
    %v117 = vadd.f32 %v104, %v116
    %v118 = vpop.f32.mrf.mxu0
    %119 = vdwg.mxu0
    %120 = vmatpush.bf16.xpose.msra.mxu0 0
    %121 = vmatpush.bf16.xpose.msra.mxu0 0
    %122 = vmatpush.bf16.xpose.msra.mxu0 0
    %123 = vmatpush.bf16.xpose.msra.mxu0 0
    %124 = vmatpush.bf16.xpose.msra.mxu0 0
    %125 = vmatpush.bf16.xpose.msra.mxu0 0
    %126 = vmatpush.bf16.xpose.msra.mxu0 0
    %127 = vmatpush.bf16.xpose.msra.mxu0 %v92
    %128 = vmatmul.bf16.gmra.mxu0 1065369472
    %v129 = vpop.f32.mrf.mxu0
    %v130 = vadd.f32 %v117, %v129
    %v131 = vpop.f32.mrf.mxu0
    %132 = vdwg.mxu0
    %133 = vmatpush.bf16.xpose.msra.mxu0 0
    %134 = vmatpush.bf16.xpose.msra.mxu0 0
    %135 = vmatpush.bf16.xpose.msra.mxu0 0
    %136 = vmatpush.bf16.xpose.msra.mxu0 0
    %137 = vmatpush.bf16.xpose.msra.mxu0 0
    %138 = vmatpush.bf16.xpose.msra.mxu0 0
    %139 = vmatpush.bf16.xpose.msra.mxu0 0
    %140 = vmatpush.bf16.xpose.msra.mxu0 %v93
    %141 = vmatmul.bf16.gmra.mxu0 1065369472
    %v142 = vpop.f32.mrf.mxu0
    %v143 = vadd.f32 %v130, %v142
    %v144 = vpop.f32.mrf.mxu0
    %145 = vdwg.mxu0
    %v146 = vmul.f32 %v143, 0.001953125
    %v147 = vsub.f32 0.0, %v78
    %v148 = vmax.f32 %v147, 0.0
    %v149 = vand.u32 2147483647, %v78
    %v150 = vsub.f32 0.0, %v149
    %v151 = vmul.f32 %v150, 1.442695
    %v152 = vpow.pop %v151
    %v153 = vadd.f32 %v152, 1.0
    %v154 = vlog2.pop %v153
    %v155 = vmul.f32 %v154, 0.6931472
    %v156 = vmul.f32 -0.5, %v152
    %v157 = vadd.f32 %v156, 1.0
    %v158 = vmul.f32 %v157, %v152
    %v159 = vand.u32 2147483647, %v152
    %vm160 = vcmp.lt.f32.partialorder %v159, 0.0004427343
    %v161 = vsel %vm160, %v158, %v155
    %v162 = vadd.f32 %v148, %v161
    %v163 = vsub.f32 1.0, %v79
    %v164 = vmul.f32 %v163, %v78
    %s165 = ssub.f32 %s80, 1.0
    %v166 = vstv %s165
    %v167 = vmul.f32 %v166, %v79
    %v168 = vadd.f32 %v167, 1.0
    %v169 = vmul.f32 %v168, %v162
    %v170 = vadd.f32 %v164, %v169
    %s171 = sadd.s32 0, 0
    %v172 = vlaneseq
    %v173 = vand.u32 %v172, 127
    %s174 = smul.u32 %s171, 8
    %v175 = vstv %s174
    %v176 = vadd.s32 %v173, %v175
    %vm177 = vcmp.lt.s32.totalorder %v176, 8
    %v178 = vmul.f32 %v170, %v146
    %v179 = vsel %vm177, %v178, 0.0
    %v180 = vld [vmem:[#allocation6] sm:$0x1]
    %vm181 = vcmask 57344
    %v182 = vsel %vm181, %v179, 0.0
    %183 = vadd.xlane.f32.xlu0 %v182
    %v184 = vpop.xlane.xlu0 %183
    %v185 = vrot.slane %v184, 4
    %v186 = vadd.f32 %v184, %v185
    %v187 = vrot.slane %v186, 2
    %v188 = vadd.f32 %v186, %v187
    %v189 = vrot.slane %v188, 1
    %v190 = vadd.f32 %v188, %v189
    %s191 = vtos %v190
    %v192 = vstv %s191
    %v193 = vadd.f32 %v180, %v192
    %vm194 = vcmask 0
    %195 = vst.msk [vmem:[#allocation6] sm:$0x1] %vm194, %v193
    // Predicated region
    $region26: #{tpu_custom_call.1} parent=1 // pred_check
      _
    $region27: #{tpu_custom_call.1} parent=1 // pred_check_branch
      %197 = sbr.rel (0) target = $region29
    $region28: #{tpu_custom_call.1} parent=1 // pred_region
      %199 = vsyncadd [#allocation5], 0
      %s201 = sshll.u32 [#allocation6], 4
      %s202 = int_to_ptr.vmem [resolvable:$true] %s201
      %s203 = sshll.u32 %s4, 4
      %s204 = int_to_ptr.hbm [resolvable:$true] %s203
      %206 = dma.vmem_to_hbm [thread:$0]  %s202, 16, %s204, [#allocation5]
    $region29: #{tpu_custom_call.1} parent=1 // pred_fallthru
      _
    // Predicated region
    $region30: #{tpu_custom_call.1} parent=1 // pred_check
      _
    $region31: #{tpu_custom_call.1} parent=1 // pred_check_branch
      %208 = sbr.rel (0) target = $region33
    $region32: #{tpu_custom_call.1} parent=1 // pred_region
      %210 = dma.done [#allocation5], 16
    $region33: #{tpu_custom_call.1} parent=1 // pred_fallthru
      _
    %211 = vsyncpa [#allocation4], 1
    %212 = vsyncpa [#allocation5], 1

</llo_original>
